<compile_context>
chip_gen: v6e
topology: v6e:2x2x1
jax: 0.10.0
libtpu: 0.0.40
codegen_flags: <defaults>
</compile_context>

<pallas_src>
import math

import jax
import jax.numpy as jnp
from jax import lax
from jax.experimental import pallas as pl
from jax.experimental.pallas import tpu as pltpu


def _round_up(x, m):
    return ((x + m - 1) // m) * m


def qnet_kernel(s_ref, a_ref, w1_ref, b1_ref, w2x_ref, w2a_ref, b2_ref,
                w3t_ref, b3_ref, out_ref):
    s = s_ref[...]                                             # (TB, S)
    a = a_ref[...]                                             # (TB, A)

    # fc1 + ReLU
    h1 = jnp.dot(s, w1_ref[...], preferred_element_type=jnp.float32)
    h1 = jnp.maximum(h1 + b1_ref[...], 0.0)                    # (TB, 128)

    # fc2 on concat(h1, a) == h1 @ W2[:128] + a @ W2[128:], then ReLU
    h2 = jnp.dot(h1, w2x_ref[...], preferred_element_type=jnp.float32)
    h2 = h2 + jnp.dot(a, w2a_ref[...], preferred_element_type=jnp.float32)
    h2 = jnp.maximum(h2 + b2_ref[...], 0.0)                    # (TB, 64)

    # fc3: contract the 64-dim hidden axis; batch rows land in lanes -> (1, TB)
    q = lax.dot_general(w3t_ref[...], h2,
                        dimension_numbers=(((1,), (1,)), ((), ())),
                        preferred_element_type=jnp.float32)
    out_ref[0] = q + b3_ref[0, 0]                              # lane-dense store


def q_network_forward(s, a, kernel_params, tile_b=4096):
    """s: (B, state_dim) f32, a: (B, action_dim) f32 -> (B, 1) f32."""
    w1, b1, w2x, w2a, b2, w3t, b3 = kernel_params
    B, S = s.shape
    A = a.shape[1]

    s = s.astype(jnp.float32)
    a = a.astype(jnp.float32)

    # Batch tile: multiple of 128 (keeps the (1, TB) output block lane-dense),
    # clamped so the grid has >= 2 steps when B is large enough (v7x 2 TCs).
    tile_b = max(128, _round_up(tile_b, 128))
    b128 = _round_up(B, 128)
    half = _round_up(max(b128 // 2, 128), 128)
    TB = min(tile_b, half)
    B_pad = _round_up(B, TB)
    if B_pad != B:
        # Padded rows are computed and discarded; pad is only taken when needed.
        s = jnp.pad(s, ((0, B_pad - B), (0, 0)))
        a = jnp.pad(a, ((0, B_pad - B), (0, 0)))

    n_tiles = B_pad // TB

    out = pl.pallas_call(
        qnet_kernel,
        out_shape=jax.ShapeDtypeStruct((n_tiles, 1, TB), jnp.float32),
        grid=(n_tiles,),
        in_specs=[
            # batch-tiled activations (two narrow streams, no concat copy)
            pl.BlockSpec((TB, S), lambda i: (i, 0)),
            pl.BlockSpec((TB, A), lambda i: (i, 0)),
            # weights / biases: constant block index -> stay VMEM-resident
            pl.BlockSpec(w1.shape, lambda i: (0, 0)),
            pl.BlockSpec(b1.shape, lambda i: (0, 0)),
            pl.BlockSpec(w2x.shape, lambda i: (0, 0)),
            pl.BlockSpec(w2a.shape, lambda i: (0, 0)),
            pl.BlockSpec(b2.shape, lambda i: (0, 0)),
            pl.BlockSpec(w3t.shape, lambda i: (0, 0)),
            # scalar fc3 bias in SMEM (no padded VMEM tile / DMA stream)
            pl.BlockSpec((1, 1), lambda i: (0, 0),
                         memory_space=pltpu.MemorySpace.SMEM),
        ],
        out_specs=pl.BlockSpec((1, 1, TB), lambda i: (i, 0, 0)),
        compiler_params=pltpu.CompilerParams(
            dimension_semantics=("parallel",),    # shard batch grid on v7x 2 TCs
            vmem_limit_bytes=48 * 1024 * 1024,    # safe on v7x (64 MiB physical)
        ),
    )(s, a, w1, b1, w2x, w2a, b2, w3t, b3)

    # (n_tiles, 1, TB) flattens in batch order -> (B, 1)
    return out.reshape(B_pad)[:B].reshape(B, 1)


def init_params(key, state_dim, action_dim):
    """Deterministic init mirroring the PyTorch module's __init__.

    fc1/fc2: default nn.Linear init U(-1/sqrt(fan_in), 1/sqrt(fan_in));
    fc3 weight & bias: U(-0.003, 0.003). Logical weights stored as [in, out].
    """
    k1, k2, k3, k4, k5, k6 = jax.random.split(key, 6)

    def u(k, shape, bound):
        return jax.random.uniform(k, shape, jnp.float32, -bound, bound)

    bound1 = 1.0 / math.sqrt(state_dim)
    w1 = u(k1, (state_dim, 128), bound1)
    b1 = u(k2, (1, 128), bound1)

    fan_in2 = 128 + action_dim
    bound2 = 1.0 / math.sqrt(fan_in2)
    w2 = u(k3, (fan_in2, 64), bound2)
    b2 = u(k4, (1, 64), bound2)

    w3 = u(k5, (64, 1), 0.003)
    b3 = u(k6, (1, 1), 0.003)

    return dict(w1=w1, b1=b1, w2=w2, b2=b2, w3=w3, b3=b3)


def pack_params(p):
    """Split fc2's weight into its h1 part and action part; transpose fc3."""
    return (p["w1"], p["b1"], p["w2"][:128, :], p["w2"][128:, :], p["b2"],
            p["w3"].T, p["b3"])


def q_network_ref(s, a, p):
    """Pure-JAX reference matching the PyTorch forward exactly."""
    x = jax.nn.relu(s @ p["w1"] + p["b1"])
    x = jnp.concatenate([x, a], axis=1)
    x = jax.nn.relu(x @ p["w2"] + p["b2"])
    return x @ p["w3"] + p["b3"]


if __name__ == "__main__":
    state_dim, action_dim = 16, 4

    key = jax.random.PRNGKey(0)
    kp, kd = jax.random.split(key)

    logical = init_params(kp, state_dim, action_dim)
    kernel_params = pack_params(logical)

    # (batch, tile_b): small single-tile padded case + multi-step grid with
    # batch padding (covers the pad/slice path and the >1 grid steps).
    for batch, tile_b in ((8, 4096), (300, 128)):
        ks, ka = jax.random.split(jax.random.fold_in(kd, batch))
        s = jax.random.normal(ks, (batch, state_dim), jnp.float32)
        a = jax.random.normal(ka, (batch, action_dim), jnp.float32)

        out = jax.block_until_ready(
            q_network_forward(s, a, kernel_params, tile_b=tile_b))
        ref = q_network_ref(s, a, logical)

        assert out.shape == (batch, 1)
        assert jnp.allclose(out, ref, atol=1e-5, rtol=1e-5), (
            f"mismatch vs reference (batch={batch})")

    print("KERNEL_OK")
</pallas_src>

<mosaic_0001>
module attributes {stable_mosaic.version = 11 : i64} {
  func.func @qnet_kernel(%arg0: i32, %arg1: memref<128x16xf32, #tpu.memory_space<vmem>>, %arg2: memref<128x4xf32, #tpu.memory_space<vmem>>, %arg3: memref<16x128xf32, #tpu.memory_space<vmem>>, %arg4: memref<1x128xf32, #tpu.memory_space<vmem>>, %arg5: memref<128x64xf32, #tpu.memory_space<vmem>>, %arg6: memref<4x64xf32, #tpu.memory_space<vmem>>, %arg7: memref<1x64xf32, #tpu.memory_space<vmem>>, %arg8: memref<1x64xf32, #tpu.memory_space<vmem>>, %arg9: memref<1x1xf32, #tpu.memory_space<smem>>, %arg10: memref<1x1x128xf32, #tpu.memory_space<vmem>>) attributes {dimension_semantics = [#tpu.dimension_semantics<parallel>], iteration_bounds = array<i64: 1>, scalar_prefetch = 0 : i64, scratch_operands = 0 : i64, tpu.core_type = #tpu.core_type<tc>, window_params = [{transform_indices = @transform_0, window_bounds = array<i64: 128, 16>}, {transform_indices = @transform_1, window_bounds = array<i64: 128, 4>}, {pipeline_mode = #tpu.pipeline_mode<synchronous>, transform_indices = @transform_2, window_bounds = array<i64: 16, 128>}, {pipeline_mode = #tpu.pipeline_mode<synchronous>, transform_indices = @transform_3, window_bounds = array<i64: 1, 128>}, {pipeline_mode = #tpu.pipeline_mode<synchronous>, transform_indices = @transform_4, window_bounds = array<i64: 128, 64>}, {pipeline_mode = #tpu.pipeline_mode<synchronous>, transform_indices = @transform_5, window_bounds = array<i64: 4, 64>}, {pipeline_mode = #tpu.pipeline_mode<synchronous>, transform_indices = @transform_6, window_bounds = array<i64: 1, 64>}, {pipeline_mode = #tpu.pipeline_mode<synchronous>, transform_indices = @transform_7, window_bounds = array<i64: 1, 64>}, {transform_indices = @transform_8, window_bounds = array<i64: 1, 1>}, {transform_indices = @transform_9, window_bounds = array<i64: 1, 1, 128>}]} {
    %c0 = arith.constant 0 : index
    %c0_0 = arith.constant 0 : index
    %0 = vector.load %arg1[%c0, %c0_0] : memref<128x16xf32, #tpu.memory_space<vmem>>, vector<128x16xf32>
    %c0_1 = arith.constant 0 : index
    %c0_2 = arith.constant 0 : index
    %1 = vector.load %arg2[%c0_1, %c0_2] : memref<128x4xf32, #tpu.memory_space<vmem>>, vector<128x4xf32>
    %c0_3 = arith.constant 0 : index
    %c0_4 = arith.constant 0 : index
    %2 = vector.load %arg3[%c0_3, %c0_4] : memref<16x128xf32, #tpu.memory_space<vmem>>, vector<16x128xf32>
    %cst = arith.constant dense<0.000000e+00> : vector<128x128xf32>
    %3 = tpu.matmul %0, %2, %cst {dimension_numbers = #tpu.dot_dimension_numbers<[1], [0], [0], [1], [0, 0, 1, 1], [], []>} : vector<128x16xf32>, vector<16x128xf32>, vector<128x128xf32> -> vector<128x128xf32>
    %c0_5 = arith.constant 0 : index
    %c0_6 = arith.constant 0 : index
    %4 = vector.load %arg4[%c0_5, %c0_6] : memref<1x128xf32, #tpu.memory_space<vmem>>, vector<1x128xf32>
    %5 = vector.broadcast %4 : vector<1x128xf32> to vector<128x128xf32>
    %6 = arith.addf %3, %5 : vector<128x128xf32>
    %cst_7 = arith.constant 0.000000e+00 : f32
    %7 = vector.broadcast %cst_7 : f32 to vector<128x128xf32>
    %8 = arith.maximumf %6, %7 : vector<128x128xf32>
    %c0_8 = arith.constant 0 : index
    %c0_9 = arith.constant 0 : index
    %9 = vector.load %arg5[%c0_8, %c0_9] : memref<128x64xf32, #tpu.memory_space<vmem>>, vector<128x64xf32>
    %cst_10 = arith.constant dense<0.000000e+00> : vector<128x64xf32>
    %10 = tpu.matmul %8, %9, %cst_10 {dimension_numbers = #tpu.dot_dimension_numbers<[1], [0], [0], [1], [0, 0, 1, 1], [], []>} : vector<128x128xf32>, vector<128x64xf32>, vector<128x64xf32> -> vector<128x64xf32>
    %c0_11 = arith.constant 0 : index
    %c0_12 = arith.constant 0 : index
    %11 = vector.load %arg6[%c0_11, %c0_12] : memref<4x64xf32, #tpu.memory_space<vmem>>, vector<4x64xf32>
    %cst_13 = arith.constant dense<0.000000e+00> : vector<128x64xf32>
    %12 = tpu.matmul %1, %11, %cst_13 {dimension_numbers = #tpu.dot_dimension_numbers<[1], [0], [0], [1], [0, 0, 1, 1], [], []>} : vector<128x4xf32>, vector<4x64xf32>, vector<128x64xf32> -> vector<128x64xf32>
    %13 = arith.addf %10, %12 : vector<128x64xf32>
    %c0_14 = arith.constant 0 : index
    %c0_15 = arith.constant 0 : index
    %14 = vector.load %arg7[%c0_14, %c0_15] : memref<1x64xf32, #tpu.memory_space<vmem>>, vector<1x64xf32>
    %15 = vector.broadcast %14 : vector<1x64xf32> to vector<128x64xf32>
    %16 = arith.addf %13, %15 : vector<128x64xf32>
    %cst_16 = arith.constant 0.000000e+00 : f32
    %17 = vector.broadcast %cst_16 : f32 to vector<128x64xf32>
    %18 = arith.maximumf %16, %17 : vector<128x64xf32>
    %c0_17 = arith.constant 0 : index
    %c0_18 = arith.constant 0 : index
    %19 = vector.load %arg8[%c0_17, %c0_18] : memref<1x64xf32, #tpu.memory_space<vmem>>, vector<1x64xf32>
    %cst_19 = arith.constant dense<0.000000e+00> : vector<1x128xf32>
    %20 = tpu.matmul %19, %18, %cst_19 {dimension_numbers = #tpu.dot_dimension_numbers<[1], [1], [0], [0], [0, 0, 1, 0], [], []>} : vector<1x64xf32>, vector<128x64xf32>, vector<1x128xf32> -> vector<1x128xf32>
    %c0_20 = arith.constant 0 : index
    %c0_21 = arith.constant 0 : index
    %21 = memref.load %arg9[%c0_20, %c0_21] : memref<1x1xf32, #tpu.memory_space<smem>>
    %22 = vector.broadcast %21 : f32 to vector<1x128xf32>
    %23 = arith.addf %20, %22 : vector<1x128xf32>
    %c0_22 = arith.constant 0 : index
    %c0_23 = arith.constant 0 : index
    %c0_24 = arith.constant 0 : index
    %24 = vector.load %arg10[%c0_22, %c0_23, %c0_24] : memref<1x1x128xf32, #tpu.memory_space<vmem>>, vector<1x1x128xf32>
    %25 = vector.shape_cast %24 : vector<1x1x128xf32> to vector<1x128xf32>
    %26 = vector.shape_cast %23 : vector<1x128xf32> to vector<1x1x128xf32>
    tpu.vector_store %arg10[%c0_22, %c0_23, %c0_24], %26 {strides = array<i32>} : memref<1x1x128xf32, #tpu.memory_space<vmem>>, vector<1x1x128xf32>,
    return
  }
  func.func @transform_0(%arg0: i32) -> (i32, i32) {
    %c0_i32 = arith.constant 0 : i32
    %c0_i32_0 = arith.constant 0 : i32
    return %arg0, %c0_i32 : i32, i32
  }
  func.func @transform_1(%arg0: i32) -> (i32, i32) {
    %c0_i32 = arith.constant 0 : i32
    %c0_i32_0 = arith.constant 0 : i32
    return %arg0, %c0_i32 : i32, i32
  }
  func.func @transform_2(%arg0: i32) -> (i32, i32) {
    %c0_i32 = arith.constant 0 : i32
    %c0_i32_0 = arith.constant 0 : i32
    %c0_i32_1 = arith.constant 0 : i32
    return %c0_i32, %c0_i32_0 : i32, i32
  }
  func.func @transform_3(%arg0: i32) -> (i32, i32) {
    %c0_i32 = arith.constant 0 : i32
    %c0_i32_0 = arith.constant 0 : i32
    %c0_i32_1 = arith.constant 0 : i32
    return %c0_i32, %c0_i32_0 : i32, i32
  }
  func.func @transform_4(%arg0: i32) -> (i32, i32) {
    %c0_i32 = arith.constant 0 : i32
    %c0_i32_0 = arith.constant 0 : i32
    %c0_i32_1 = arith.constant 0 : i32
    return %c0_i32, %c0_i32_0 : i32, i32
  }
  func.func @transform_5(%arg0: i32) -> (i32, i32) {
    %c0_i32 = arith.constant 0 : i32
    %c0_i32_0 = arith.constant 0 : i32
    %c0_i32_1 = arith.constant 0 : i32
    return %c0_i32, %c0_i32_0 : i32, i32
  }
  func.func @transform_6(%arg0: i32) -> (i32, i32) {
    %c0_i32 = arith.constant 0 : i32
    %c0_i32_0 = arith.constant 0 : i32
    %c0_i32_1 = arith.constant 0 : i32
    return %c0_i32, %c0_i32_0 : i32, i32
  }
  func.func @transform_7(%arg0: i32) -> (i32, i32) {
    %c0_i32 = arith.constant 0 : i32
    %c0_i32_0 = arith.constant 0 : i32
    %c0_i32_1 = arith.constant 0 : i32
    return %c0_i32, %c0_i32_0 : i32, i32
  }
  func.func @transform_8(%arg0: i32) -> (i32, i32) {
    %c0_i32 = arith.constant 0 : i32
    %c0_i32_0 = arith.constant 0 : i32
    %c0_i32_1 = arith.constant 0 : i32
    return %c0_i32, %c0_i32_0 : i32, i32
  }
  func.func @transform_9(%arg0: i32) -> (i32, i32, i32) {
    %c0_i32 = arith.constant 0 : i32
    %c0_i32_0 = arith.constant 0 : i32
    %c0_i32_1 = arith.constant 0 : i32
    return %arg0, %c0_i32, %c0_i32_0 : i32, i32, i32
  }
}

</mosaic_0001>

<llo_original>
// kernel: tpu_custom_call.1
$region0: #{tpu_custom_call.1}
  #allocation0 [shape = 'u32[]', space=smem, size = 0x4, offset = 0x4, fixed_abs, tag = 'smem constant byte address 0x4 - core index']
  #allocation1 [shape = 'u32[144,128]{1,0:T(1,128)}', space=vmem, size = 0x12000, scoped, tag = 'internal scratch']
  #allocation2 [shape = 'f32[1,1]{1,0:T(1,128)S(6)}', space=smem, size = 0x200, scoped, tag = 'scoped memory for tpu_custom_call.1']
  %s0 = inlined_call_operand.vmem [shape: f32[128,16], index: 0, kind: input, shape index: {}]
  %s1 = inlined_call_operand.vmem [shape: f32[128,4], index: 1, kind: input, shape index: {}]
  %s2 = inlined_call_operand.vmem [shape: f32[16,128], index: 2, kind: input, shape index: {}]
  %s3 = inlined_call_operand.vmem [shape: f32[1,128], index: 3, kind: input, shape index: {}]
  %s4 = inlined_call_operand.vmem [shape: f32[128,64], index: 4, kind: input, shape index: {}]
  %s5 = inlined_call_operand.vmem [shape: f32[4,64], index: 5, kind: input, shape index: {}]
  %s6 = inlined_call_operand.vmem [shape: f32[1,64], index: 6, kind: input, shape index: {}]
  %s7 = inlined_call_operand.vmem [shape: f32[1,64], index: 7, kind: input, shape index: {}]
  %s8 = inlined_call_operand.<no memory space> [shape: f32[1,1], index: 8, kind: input, shape index: {}]
  %s9 = inlined_call_operand.hbm [shape: f32[1,1,128], index: 9, kind: output, shape index: {}]
  %s10 = sld [smem:[#allocation0]]
  $region46: #{tpu_custom_call.1} parent=0
    _
  %s12 = ssub.s32 1, %s10
  %s13 = scalar_select 0, %s12, %s10
  %14 = sst [smem:[#allocation2]] %s8
  $region1: #{tpu_custom_call.1} parent=0
    #allocation3 [shape = 'u8[512]{0}', space=vmem, size = 0x400, scoped, tag = 'output window, operand 0, single buffered']
    #allocation4 [shape = 's32[1]{0}', space=sflag, size = 0x4, scoped, tag = 'scoped memory for tpu_custom_call.1']
    %15 = vsyncpa [#allocation4], 0
    // Predicated region
    $region2: #{tpu_custom_call.1} parent=1 // pred_check
      _
    $region3: #{tpu_custom_call.1} parent=1 // pred_check_branch
      %17 = sbr.rel (0) target = $region5
    $region4: #{tpu_custom_call.1} parent=1 // pred_region
      _
    $region5: #{tpu_custom_call.1} parent=1 // pred_fallthru
      _
    // Predicated region
    $region6: #{tpu_custom_call.1} parent=1 // pred_check
      _
    $region7: #{tpu_custom_call.1} parent=1 // pred_check_branch
      %19 = sbr.rel (0) target = $region9
    $region8: #{tpu_custom_call.1} parent=1 // pred_region
      _
    $region9: #{tpu_custom_call.1} parent=1 // pred_fallthru
      _
    // Predicated region
    $region10: #{tpu_custom_call.1} parent=1 // pred_check
      _
    $region11: #{tpu_custom_call.1} parent=1 // pred_check_branch
      %21 = sbr.rel (0) target = $region13
    $region12: #{tpu_custom_call.1} parent=1 // pred_region
      _
    $region13: #{tpu_custom_call.1} parent=1 // pred_fallthru
      _
    // Predicated region
    $region14: #{tpu_custom_call.1} parent=1 // pred_check
      _
    $region15: #{tpu_custom_call.1} parent=1 // pred_check_branch
      %23 = sbr.rel (0) target = $region17
    $region16: #{tpu_custom_call.1} parent=1 // pred_region
      _
    $region17: #{tpu_custom_call.1} parent=1 // pred_fallthru
      _
    // Predicated region
    $region18: #{tpu_custom_call.1} parent=1 // pred_check
      _
    $region19: #{tpu_custom_call.1} parent=1 // pred_check_branch
      %25 = sbr.rel (0) target = $region21
    $region20: #{tpu_custom_call.1} parent=1 // pred_region
      _
    $region21: #{tpu_custom_call.1} parent=1 // pred_fallthru
      _
    // Predicated region
    $region22: #{tpu_custom_call.1} parent=1 // pred_check
      _
    $region23: #{tpu_custom_call.1} parent=1 // pred_check_branch
      %27 = sbr.rel (0) target = $region25
    $region24: #{tpu_custom_call.1} parent=1 // pred_region
      _
    $region25: #{tpu_custom_call.1} parent=1 // pred_fallthru
      _
    // Predicated region
    $region26: #{tpu_custom_call.1} parent=1 // pred_check
      _
    $region27: #{tpu_custom_call.1} parent=1 // pred_check_branch
      %29 = sbr.rel (0) target = $region29
    $region28: #{tpu_custom_call.1} parent=1 // pred_region
      _
    $region29: #{tpu_custom_call.1} parent=1 // pred_fallthru
      _
    // Predicated region
    $region30: #{tpu_custom_call.1} parent=1 // pred_check
      _
    $region31: #{tpu_custom_call.1} parent=1 // pred_check_branch
      %31 = sbr.rel (0) target = $region33
    $region32: #{tpu_custom_call.1} parent=1 // pred_region
      _
    $region33: #{tpu_custom_call.1} parent=1 // pred_fallthru
      _
    // Predicated region
    $region34: #{tpu_custom_call.1} parent=1 // pred_check
      _
    $region35: #{tpu_custom_call.1} parent=1 // pred_check_branch
      %33 = sbr.rel (0) target = $region37
    $region36: #{tpu_custom_call.1} parent=1 // pred_region
      _
    $region37: #{tpu_custom_call.1} parent=1 // pred_fallthru
      _
    %v34 = vld [vmem:[%s0] sm:$0xff]
    %v35 = vld [vmem:[%s0 + $0x8] sm:$0xff]
    %v36 = vld [vmem:[%s0 + $0x10] sm:$0xff]
    %v37 = vld [vmem:[%s0 + $0x18] sm:$0xff]
    %v38 = vld [vmem:[%s0 + $0x20] sm:$0xff]
    %v39 = vld [vmem:[%s0 + $0x28] sm:$0xff]
    %v40 = vld [vmem:[%s0 + $0x30] sm:$0xff]
    %v41 = vld [vmem:[%s0 + $0x38] sm:$0xff]
    %v42 = vld [vmem:[%s0 + $0x40] sm:$0xff]
    %v43 = vld [vmem:[%s0 + $0x48] sm:$0xff]
    %v44 = vld [vmem:[%s0 + $0x50] sm:$0xff]
    %v45 = vld [vmem:[%s0 + $0x58] sm:$0xff]
    %v46 = vld [vmem:[%s0 + $0x60] sm:$0xff]
    %v47 = vld [vmem:[%s0 + $0x68] sm:$0xff]
    %v48 = vld [vmem:[%s0 + $0x70] sm:$0xff]
    %v49 = vld [vmem:[%s0 + $0x78] sm:$0xff]
    %v50 = vld [vmem:[%s1] sm:$0xff]
    %v51 = vld [vmem:[%s1 + $0x8] sm:$0xff]
    %v52 = vld [vmem:[%s1 + $0x10] sm:$0xff]
    %v53 = vld [vmem:[%s1 + $0x18] sm:$0xff]
    %v54 = vld [vmem:[%s1 + $0x20] sm:$0xff]
    %v55 = vld [vmem:[%s1 + $0x28] sm:$0xff]
    %v56 = vld [vmem:[%s1 + $0x30] sm:$0xff]
    %v57 = vld [vmem:[%s1 + $0x38] sm:$0xff]
    %v58 = vld [vmem:[%s1 + $0x40] sm:$0xff]
    %v59 = vld [vmem:[%s1 + $0x48] sm:$0xff]
    %v60 = vld [vmem:[%s1 + $0x50] sm:$0xff]
    %v61 = vld [vmem:[%s1 + $0x58] sm:$0xff]
    %v62 = vld [vmem:[%s1 + $0x60] sm:$0xff]
    %v63 = vld [vmem:[%s1 + $0x68] sm:$0xff]
    %v64 = vld [vmem:[%s1 + $0x70] sm:$0xff]
    %v65 = vld [vmem:[%s1 + $0x78] sm:$0xff]
    %v66 = vld [vmem:[%s2] sm:$0xff]
    %v67 = vld [vmem:[%s2 + $0x8] sm:$0xff]
    %v68 = vld [vmem:[%s3] sm:$0x1]
    %v70 = vlaneseq
    %v71 = vshrl.u32 %v70, 7
    %v72 = vsub.s32 0, %v71
    %v73 = vrot.slane %v68, %v72
    %vm75 = vcmask 130048
    %v77 = vsel %vm75, %v34, 0
    %v80 = vsel %vm75, %v35, 0
    %v83 = vsel %vm75, %v36, 0
    %v86 = vsel %vm75, %v37, 0
    %v89 = vsel %vm75, %v38, 0
    %v92 = vsel %vm75, %v39, 0
    %v95 = vsel %vm75, %v40, 0
    %v98 = vsel %vm75, %v41, 0
    %v101 = vsel %vm75, %v42, 0
    %v104 = vsel %vm75, %v43, 0
    %v107 = vsel %vm75, %v44, 0
    %v110 = vsel %vm75, %v45, 0
    %v113 = vsel %vm75, %v46, 0
    %v116 = vsel %vm75, %v47, 0
    %v119 = vsel %vm75, %v48, 0
    %v122 = vsel %vm75, %v49, 0
    %124 = vmatprep.subr.mxu0 0.0
    %125 = vmatpush1.msra.mxu0 0.0
    %126 = vmatprep.subr.mxu0 0.0
    %127 = vmatpush1.msra.mxu0 0.0
    %128 = vmatprep.subr.mxu0 0.0
    %129 = vmatpush1.msra.mxu0 0.0
    %130 = vmatprep.subr.mxu0 0.0
    %131 = vmatpush1.msra.mxu0 0.0
    %132 = vmatprep.subr.mxu0 0.0
    %133 = vmatpush1.msra.mxu0 0.0
    %134 = vmatprep.subr.mxu0 0.0
    %135 = vmatpush1.msra.mxu0 0.0
    %136 = vmatprep.subr.mxu0 0.0
    %137 = vmatpush1.msra.mxu0 0.0
    %138 = vmatprep.subr.mxu0 0.0
    %139 = vmatpush1.msra.mxu0 0.0
    %140 = vmatprep.subr.mxu0 0.0
    %141 = vmatpush1.msra.mxu0 0.0
    %142 = vmatprep.subr.mxu0 0.0
    %143 = vmatpush1.msra.mxu0 0.0
    %144 = vmatprep.subr.mxu0 0.0
    %145 = vmatpush1.msra.mxu0 0.0
    %146 = vmatprep.subr.mxu0 0.0
    %147 = vmatpush1.msra.mxu0 0.0
    %148 = vmatprep.subr.mxu0 0.0
    %149 = vmatpush1.msra.mxu0 0.0
    %150 = vmatprep.subr.mxu0 0.0
    %151 = vmatpush1.msra.mxu0 0.0
    %152 = vmatprep.subr.mxu0 0.0
    %153 = vmatpush1.msra.mxu0 %v67
    %154 = vmatprep.subr.mxu0 0.0
    %155 = vmatpush1.msra.mxu0 %v66
    %156 = vmatprep.subr.mxu0 0.0
    %157 = vmatpush2.msra.mxu0 0.0
    %158 = vmatprep.subr.mxu0 0.0
    %159 = vmatpush2.msra.mxu0 0.0
    %160 = vmatprep.subr.mxu0 0.0
    %161 = vmatpush2.msra.mxu0 0.0
    %162 = vmatprep.subr.mxu0 0.0
    %163 = vmatpush2.msra.mxu0 0.0
    %164 = vmatprep.subr.mxu0 0.0
    %165 = vmatpush2.msra.mxu0 0.0
    %166 = vmatprep.subr.mxu0 0.0
    %167 = vmatpush2.msra.mxu0 0.0
    %168 = vmatprep.subr.mxu0 0.0
    %169 = vmatpush2.msra.mxu0 0.0
    %170 = vmatprep.subr.mxu0 0.0
    %171 = vmatpush2.msra.mxu0 0.0
    %172 = vmatprep.subr.mxu0 0.0
    %173 = vmatpush2.msra.mxu0 0.0
    %174 = vmatprep.subr.mxu0 0.0
    %175 = vmatpush2.msra.mxu0 0.0
    %176 = vmatprep.subr.mxu0 0.0
    %177 = vmatpush2.msra.mxu0 0.0
    %178 = vmatprep.subr.mxu0 0.0
    %179 = vmatpush2.msra.mxu0 0.0
    %180 = vmatprep.subr.mxu0 0.0
    %181 = vmatpush2.msra.mxu0 0.0
    %182 = vmatprep.subr.mxu0 0.0
    %183 = vmatpush2.msra.mxu0 0.0
    %184 = vmatprep.subr.mxu0 0.0
    %185 = vmatpush2.msra.mxu0 0.0
    %186 = vmatprep.subr.mxu0 0.0
    %187 = vmatpush2.msra.mxu0 0.0
    %188 = vmatprep.mubr.f32.mxu0 0.0
    %189 = vmatmul.mubr.f32.gmra.mxu0 %v77
    %v190 = vpop.f32.mrf.mxu0
    %v191 = vadd.f32 %v73, %v190
    %v192 = vpop.f32.mrf.mxu0
    %193 = vmatprep.mubr.f32.mxu0 0.0
    %194 = vmatmul.mubr.f32.gmra.mxu0 %v80
    %v195 = vpop.f32.mrf.mxu0
    %v196 = vadd.f32 %v73, %v195
    %v197 = vpop.f32.mrf.mxu0
    %198 = vmatprep.mubr.f32.mxu0 0.0
    %199 = vmatmul.mubr.f32.gmra.mxu0 %v83
    %v200 = vpop.f32.mrf.mxu0
    %v201 = vadd.f32 %v73, %v200
    %v202 = vpop.f32.mrf.mxu0
    %203 = vmatprep.mubr.f32.mxu0 0.0
    %204 = vmatmul.mubr.f32.gmra.mxu0 %v86
    %v205 = vpop.f32.mrf.mxu0
    %v206 = vadd.f32 %v73, %v205
    %v207 = vpop.f32.mrf.mxu0
    %208 = vmatprep.mubr.f32.mxu0 0.0
    %209 = vmatmul.mubr.f32.gmra.mxu0 %v89
    %v210 = vpop.f32.mrf.mxu0
    %v211 = vadd.f32 %v73, %v210
    %v212 = vpop.f32.mrf.mxu0
    %213 = vmatprep.mubr.f32.mxu0 0.0
    %214 = vmatmul.mubr.f32.gmra.mxu0 %v92
    %v215 = vpop.f32.mrf.mxu0
    %v216 = vadd.f32 %v73, %v215
    %v217 = vpop.f32.mrf.mxu0
    %218 = vmatprep.mubr.f32.mxu0 0.0
    %219 = vmatmul.mubr.f32.gmra.mxu0 %v95
    %v220 = vpop.f32.mrf.mxu0
    %v221 = vadd.f32 %v73, %v220
    %v222 = vpop.f32.mrf.mxu0
    %223 = vmatprep.mubr.f32.mxu0 0.0
    %224 = vmatmul.mubr.f32.gmra.mxu0 %v98
    %v225 = vpop.f32.mrf.mxu0
    %v226 = vadd.f32 %v73, %v225
    %v227 = vpop.f32.mrf.mxu0
    %228 = vmatprep.mubr.f32.mxu0 0.0
    %229 = vmatmul.mubr.f32.gmra.mxu0 %v101
    %v230 = vpop.f32.mrf.mxu0
    %v231 = vadd.f32 %v73, %v230
    %v232 = vpop.f32.mrf.mxu0
    %233 = vmatprep.mubr.f32.mxu0 0.0
    %234 = vmatmul.mubr.f32.gmra.mxu0 %v104
    %v235 = vpop.f32.mrf.mxu0
    %v236 = vadd.f32 %v73, %v235
    %v237 = vpop.f32.mrf.mxu0
    %238 = vmatprep.mubr.f32.mxu0 0.0
    %239 = vmatmul.mubr.f32.gmra.mxu0 %v107
    %v240 = vpop.f32.mrf.mxu0
    %v241 = vadd.f32 %v73, %v240
    %v242 = vpop.f32.mrf.mxu0
    %243 = vmatprep.mubr.f32.mxu0 0.0
    %244 = vmatmul.mubr.f32.gmra.mxu0 %v110
    %v245 = vpop.f32.mrf.mxu0
    %v246 = vadd.f32 %v73, %v245
    %v247 = vpop.f32.mrf.mxu0
    %248 = vmatprep.mubr.f32.mxu0 0.0
    %249 = vmatmul.mubr.f32.gmra.mxu0 %v113
    %v250 = vpop.f32.mrf.mxu0
    %v251 = vadd.f32 %v73, %v250
    %v252 = vpop.f32.mrf.mxu0
    %253 = vmatprep.mubr.f32.mxu0 0.0
    %254 = vmatmul.mubr.f32.gmra.mxu0 %v116
    %v255 = vpop.f32.mrf.mxu0
    %v256 = vadd.f32 %v73, %v255
    %v257 = vpop.f32.mrf.mxu0
    %258 = vmatprep.mubr.f32.mxu0 0.0
    %259 = vmatmul.mubr.f32.gmra.mxu0 %v119
    %v260 = vpop.f32.mrf.mxu0
    %v261 = vadd.f32 %v73, %v260
    %v262 = vpop.f32.mrf.mxu0
    %263 = vmatprep.mubr.f32.mxu0 0.0
    %264 = vmatmul.mubr.f32.gmra.mxu0 %v122
    %v265 = vpop.f32.mrf.mxu0
    %v266 = vadd.f32 %v73, %v265
    %v267 = vpop.f32.mrf.mxu0
    %268 = vdwg.mxu0
    %v269 = vmax.f32 %v191, 0.0
    %v270 = vmax.f32 %v196, 0.0
    %v271 = vmax.f32 %v201, 0.0
    %v272 = vmax.f32 %v206, 0.0
    %v273 = vmax.f32 %v211, 0.0
    %v274 = vmax.f32 %v216, 0.0
    %v275 = vmax.f32 %v221, 0.0
    %v276 = vmax.f32 %v226, 0.0
    %v277 = vmax.f32 %v231, 0.0
    %v278 = vmax.f32 %v236, 0.0
    %v279 = vmax.f32 %v241, 0.0
    %v280 = vmax.f32 %v246, 0.0
    %v281 = vmax.f32 %v251, 0.0
    %v282 = vmax.f32 %v256, 0.0
    %v283 = vmax.f32 %v261, 0.0
    %v284 = vmax.f32 %v266, 0.0
    %v285 = vld [vmem:[%s4] sm:$0xff]
    %v286 = vld [vmem:[%s4 + $0x8] sm:$0xff]
    %v287 = vld [vmem:[%s4 + $0x10] sm:$0xff]
    %v288 = vld [vmem:[%s4 + $0x18] sm:$0xff]
    %v289 = vld [vmem:[%s4 + $0x20] sm:$0xff]
    %v290 = vld [vmem:[%s4 + $0x28] sm:$0xff]
    %v291 = vld [vmem:[%s4 + $0x30] sm:$0xff]
    %v292 = vld [vmem:[%s4 + $0x38] sm:$0xff]
    %v293 = vld [vmem:[%s4 + $0x40] sm:$0xff]
    %v294 = vld [vmem:[%s4 + $0x48] sm:$0xff]
    %v295 = vld [vmem:[%s4 + $0x50] sm:$0xff]
    %v296 = vld [vmem:[%s4 + $0x58] sm:$0xff]
    %v297 = vld [vmem:[%s4 + $0x60] sm:$0xff]
    %v298 = vld [vmem:[%s4 + $0x68] sm:$0xff]
    %v299 = vld [vmem:[%s4 + $0x70] sm:$0xff]
    %v300 = vld [vmem:[%s4 + $0x78] sm:$0xff]
    %v301 = vld [vmem:[%s5] sm:$0xf]
    %vm302 = vcmask 31744
    %v304 = vsel %vm302, %v50, 0
    %v307 = vsel %vm302, %v51, 0
    %v310 = vsel %vm302, %v52, 0
    %v313 = vsel %vm302, %v53, 0
    %v316 = vsel %vm302, %v54, 0
    %v319 = vsel %vm302, %v55, 0
    %v322 = vsel %vm302, %v56, 0
    %v325 = vsel %vm302, %v57, 0
    %v328 = vsel %vm302, %v58, 0
    %v331 = vsel %vm302, %v59, 0
    %v334 = vsel %vm302, %v60, 0
    %v337 = vsel %vm302, %v61, 0
    %v340 = vsel %vm302, %v62, 0
    %v343 = vsel %vm302, %v63, 0
    %v346 = vsel %vm302, %v64, 0
    %v349 = vsel %vm302, %v65, 0
    %vm351 = vcmask 1043456
    %v353 = vsel %vm351, %v301, 0
    %355 = vmatprep.subr.mxu0 0.0
    %356 = vmatpush1.msra.mxu0 0.0
    %357 = vmatprep.subr.mxu0 0.0
    %358 = vmatpush1.msra.mxu0 0.0
    %359 = vmatprep.subr.mxu0 0.0
    %360 = vmatpush1.msra.mxu0 0.0
    %361 = vmatprep.subr.mxu0 0.0
    %362 = vmatpush1.msra.mxu0 0.0
    %363 = vmatprep.subr.mxu0 0.0
    %364 = vmatpush1.msra.mxu0 0.0
    %365 = vmatprep.subr.mxu0 0.0
    %366 = vmatpush1.msra.mxu0 0.0
    %367 = vmatprep.subr.mxu0 0.0
    %368 = vmatpush1.msra.mxu0 0.0
    %369 = vmatprep.subr.mxu0 0.0
    %370 = vmatpush1.msra.mxu0 0.0
    %371 = vmatprep.subr.mxu0 0.0
    %372 = vmatpush1.msra.mxu0 0.0
    %373 = vmatprep.subr.mxu0 0.0
    %374 = vmatpush1.msra.mxu0 0.0
    %375 = vmatprep.subr.mxu0 0.0
    %376 = vmatpush1.msra.mxu0 0.0
    %377 = vmatprep.subr.mxu0 0.0
    %378 = vmatpush1.msra.mxu0 0.0
    %379 = vmatprep.subr.mxu0 0.0
    %380 = vmatpush1.msra.mxu0 0.0
    %381 = vmatprep.subr.mxu0 0.0
    %382 = vmatpush1.msra.mxu0 0.0
    %383 = vmatprep.subr.mxu0 0.0
    %384 = vmatpush1.msra.mxu0 0.0
    %385 = vmatprep.subr.mxu0 0.0
    %386 = vmatpush1.msra.mxu0 %v353
    %387 = vmatprep.subr.mxu0 0.0
    %388 = vmatpush2.msra.mxu0 0.0
    %389 = vmatprep.subr.mxu0 0.0
    %390 = vmatpush2.msra.mxu0 0.0
    %391 = vmatprep.subr.mxu0 0.0
    %392 = vmatpush2.msra.mxu0 0.0
    %393 = vmatprep.subr.mxu0 0.0
    %394 = vmatpush2.msra.mxu0 0.0
    %395 = vmatprep.subr.mxu0 0.0
    %396 = vmatpush2.msra.mxu0 0.0
    %397 = vmatprep.subr.mxu0 0.0
    %398 = vmatpush2.msra.mxu0 0.0
    %399 = vmatprep.subr.mxu0 0.0
    %400 = vmatpush2.msra.mxu0 0.0
    %401 = vmatprep.subr.mxu0 0.0
    %402 = vmatpush2.msra.mxu0 0.0
    %403 = vmatprep.subr.mxu0 0.0
    %404 = vmatpush2.msra.mxu0 0.0
    %405 = vmatprep.subr.mxu0 0.0
    %406 = vmatpush2.msra.mxu0 0.0
    %407 = vmatprep.subr.mxu0 0.0
    %408 = vmatpush2.msra.mxu0 0.0
    %409 = vmatprep.subr.mxu0 0.0
    %410 = vmatpush2.msra.mxu0 0.0
    %411 = vmatprep.subr.mxu0 0.0
    %412 = vmatpush2.msra.mxu0 0.0
    %413 = vmatprep.subr.mxu0 0.0
    %414 = vmatpush2.msra.mxu0 0.0
    %415 = vmatprep.subr.mxu0 0.0
    %416 = vmatpush2.msra.mxu0 0.0
    %417 = vmatprep.subr.mxu0 0.0
    %418 = vmatpush2.msra.mxu0 0.0
    %419 = vmatprep.mubr.f32.mxu0 0.0
    %420 = vmatmul.mubr.f32.gmra.mxu0 %v304
    %v421 = vpop.f32.mrf.mxu0
    %v422 = vadd.f32 0.0, %v421
    %v423 = vpop.f32.mrf.mxu0
    %424 = vmatprep.mubr.f32.mxu0 0.0
    %425 = vmatmul.mubr.f32.gmra.mxu0 %v307
    %v426 = vpop.f32.mrf.mxu0
    %v427 = vadd.f32 0.0, %v426
    %v428 = vpop.f32.mrf.mxu0
    %429 = vmatprep.mubr.f32.mxu0 0.0
    %430 = vmatmul.mubr.f32.gmra.mxu0 %v310
    %v431 = vpop.f32.mrf.mxu0
    %v432 = vadd.f32 0.0, %v431
    %v433 = vpop.f32.mrf.mxu0
    %434 = vmatprep.mubr.f32.mxu0 0.0
    %435 = vmatmul.mubr.f32.gmra.mxu0 %v313
    %v436 = vpop.f32.mrf.mxu0
    %v437 = vadd.f32 0.0, %v436
    %v438 = vpop.f32.mrf.mxu0
    %439 = vmatprep.mubr.f32.mxu0 0.0
    %440 = vmatmul.mubr.f32.gmra.mxu0 %v316
    %v441 = vpop.f32.mrf.mxu0
    %v442 = vadd.f32 0.0, %v441
    %v443 = vpop.f32.mrf.mxu0
    %444 = vmatprep.mubr.f32.mxu0 0.0
    %445 = vmatmul.mubr.f32.gmra.mxu0 %v319
    %v446 = vpop.f32.mrf.mxu0
    %v447 = vadd.f32 0.0, %v446
    %v448 = vpop.f32.mrf.mxu0
    %449 = vmatprep.mubr.f32.mxu0 0.0
    %450 = vmatmul.mubr.f32.gmra.mxu0 %v322
    %v451 = vpop.f32.mrf.mxu0
    %v452 = vadd.f32 0.0, %v451
    %v453 = vpop.f32.mrf.mxu0
    %454 = vmatprep.mubr.f32.mxu0 0.0
    %455 = vmatmul.mubr.f32.gmra.mxu0 %v325
    %v456 = vpop.f32.mrf.mxu0
    %v457 = vadd.f32 0.0, %v456
    %v458 = vpop.f32.mrf.mxu0
    %459 = vmatprep.mubr.f32.mxu0 0.0
    %460 = vmatmul.mubr.f32.gmra.mxu0 %v328
    %v461 = vpop.f32.mrf.mxu0
    %v462 = vadd.f32 0.0, %v461
    %v463 = vpop.f32.mrf.mxu0
    %464 = vmatprep.mubr.f32.mxu0 0.0
    %465 = vmatmul.mubr.f32.gmra.mxu0 %v331
    %v466 = vpop.f32.mrf.mxu0
    %v467 = vadd.f32 0.0, %v466
    %v468 = vpop.f32.mrf.mxu0
    %469 = vmatprep.mubr.f32.mxu0 0.0
    %470 = vmatmul.mubr.f32.gmra.mxu0 %v334
    %v471 = vpop.f32.mrf.mxu0
    %v472 = vadd.f32 0.0, %v471
    %v473 = vpop.f32.mrf.mxu0
    %474 = vmatprep.mubr.f32.mxu0 0.0
    %475 = vmatmul.mubr.f32.gmra.mxu0 %v337
    %v476 = vpop.f32.mrf.mxu0
    %v477 = vadd.f32 0.0, %v476
    %v478 = vpop.f32.mrf.mxu0
    %479 = vmatprep.mubr.f32.mxu0 0.0
    %480 = vmatmul.mubr.f32.gmra.mxu0 %v340
    %v481 = vpop.f32.mrf.mxu0
    %v482 = vadd.f32 0.0, %v481
    %v483 = vpop.f32.mrf.mxu0
    %484 = vmatprep.mubr.f32.mxu0 0.0
    %485 = vmatmul.mubr.f32.gmra.mxu0 %v343
    %v486 = vpop.f32.mrf.mxu0
    %v487 = vadd.f32 0.0, %v486
    %v488 = vpop.f32.mrf.mxu0
    %489 = vmatprep.mubr.f32.mxu0 0.0
    %490 = vmatmul.mubr.f32.gmra.mxu0 %v346
    %v491 = vpop.f32.mrf.mxu0
    %v492 = vadd.f32 0.0, %v491
    %v493 = vpop.f32.mrf.mxu0
    %494 = vmatprep.mubr.f32.mxu0 0.0
    %495 = vmatmul.mubr.f32.gmra.mxu0 %v349
    %v496 = vpop.f32.mrf.mxu0
    %v497 = vadd.f32 0.0, %v496
    %v498 = vpop.f32.mrf.mxu0
    %499 = vdwg.mxu0
    %500 = vmatprep.subr.mxu0 0.0
    %501 = vmatpush1.msra.mxu0 %v300
    %502 = vmatprep.subr.mxu0 0.0
    %503 = vmatpush1.msra.mxu0 %v299
    %504 = vmatprep.subr.mxu0 0.0
    %505 = vmatpush1.msra.mxu0 %v298
    %506 = vmatprep.subr.mxu0 0.0
    %507 = vmatpush1.msra.mxu0 %v297
    %508 = vmatprep.subr.mxu0 0.0
    %509 = vmatpush1.msra.mxu0 %v296
    %510 = vmatprep.subr.mxu0 0.0
    %511 = vmatpush1.msra.mxu0 %v295
    %512 = vmatprep.subr.mxu0 0.0
    %513 = vmatpush1.msra.mxu0 %v294
    %514 = vmatprep.subr.mxu0 0.0
    %515 = vmatpush1.msra.mxu0 %v293
    %516 = vmatprep.subr.mxu0 0.0
    %517 = vmatpush1.msra.mxu0 %v292
    %518 = vmatprep.subr.mxu0 0.0
    %519 = vmatpush1.msra.mxu0 %v291
    %520 = vmatprep.subr.mxu0 0.0
    %521 = vmatpush1.msra.mxu0 %v290
    %522 = vmatprep.subr.mxu0 0.0
    %523 = vmatpush1.msra.mxu0 %v289
    %524 = vmatprep.subr.mxu0 0.0
    %525 = vmatpush1.msra.mxu0 %v288
    %526 = vmatprep.subr.mxu0 0.0
    %527 = vmatpush1.msra.mxu0 %v287
    %528 = vmatprep.subr.mxu0 0.0
    %529 = vmatpush1.msra.mxu0 %v286
    %530 = vmatprep.subr.mxu0 0.0
    %531 = vmatpush1.msra.mxu0 %v285
    %532 = vmatprep.subr.mxu0 0.0
    %533 = vmatpush2.msra.mxu0 0.0
    %534 = vmatprep.subr.mxu0 0.0
    %535 = vmatpush2.msra.mxu0 0.0
    %536 = vmatprep.subr.mxu0 0.0
    %537 = vmatpush2.msra.mxu0 0.0
    %538 = vmatprep.subr.mxu0 0.0
    %539 = vmatpush2.msra.mxu0 0.0
    %540 = vmatprep.subr.mxu0 0.0
    %541 = vmatpush2.msra.mxu0 0.0
    %542 = vmatprep.subr.mxu0 0.0
    %543 = vmatpush2.msra.mxu0 0.0
    %544 = vmatprep.subr.mxu0 0.0
    %545 = vmatpush2.msra.mxu0 0.0
    %546 = vmatprep.subr.mxu0 0.0
    %547 = vmatpush2.msra.mxu0 0.0
    %548 = vmatprep.subr.mxu0 0.0
    %549 = vmatpush2.msra.mxu0 0.0
    %550 = vmatprep.subr.mxu0 0.0
    %551 = vmatpush2.msra.mxu0 0.0
    %552 = vmatprep.subr.mxu0 0.0
    %553 = vmatpush2.msra.mxu0 0.0
    %554 = vmatprep.subr.mxu0 0.0
    %555 = vmatpush2.msra.mxu0 0.0
    %556 = vmatprep.subr.mxu0 0.0
    %557 = vmatpush2.msra.mxu0 0.0
    %558 = vmatprep.subr.mxu0 0.0
    %559 = vmatpush2.msra.mxu0 0.0
    %560 = vmatprep.subr.mxu0 0.0
    %561 = vmatpush2.msra.mxu0 0.0
    %562 = vmatprep.subr.mxu0 0.0
    %563 = vmatpush2.msra.mxu0 0.0
    %564 = vmatprep.mubr.f32.mxu0 0.0
    %565 = vmatmul.mubr.f32.gmra.mxu0 %v269
    %v566 = vpop.f32.mrf.mxu0
    %v567 = vadd.f32 %v422, %v566
    %v568 = vpop.f32.mrf.mxu0
    %569 = vmatprep.mubr.f32.mxu0 0.0
    %570 = vmatmul.mubr.f32.gmra.mxu0 %v270
    %v571 = vpop.f32.mrf.mxu0
    %v572 = vadd.f32 %v427, %v571
    %v573 = vpop.f32.mrf.mxu0
    %574 = vmatprep.mubr.f32.mxu0 0.0
    %575 = vmatmul.mubr.f32.gmra.mxu0 %v271
    %v576 = vpop.f32.mrf.mxu0
    %v577 = vadd.f32 %v432, %v576
    %v578 = vpop.f32.mrf.mxu0
    %579 = vmatprep.mubr.f32.mxu0 0.0
    %580 = vmatmul.mubr.f32.gmra.mxu0 %v272
    %v581 = vpop.f32.mrf.mxu0
    %v582 = vadd.f32 %v437, %v581
    %v583 = vpop.f32.mrf.mxu0
    %584 = vmatprep.mubr.f32.mxu0 0.0
    %585 = vmatmul.mubr.f32.gmra.mxu0 %v273
    %v586 = vpop.f32.mrf.mxu0
    %v587 = vadd.f32 %v442, %v586
    %v588 = vpop.f32.mrf.mxu0
    %589 = vmatprep.mubr.f32.mxu0 0.0
    %590 = vmatmul.mubr.f32.gmra.mxu0 %v274
    %v591 = vpop.f32.mrf.mxu0
    %v592 = vadd.f32 %v447, %v591
    %v593 = vpop.f32.mrf.mxu0
    %594 = vmatprep.mubr.f32.mxu0 0.0
    %595 = vmatmul.mubr.f32.gmra.mxu0 %v275
    %v596 = vpop.f32.mrf.mxu0
    %v597 = vadd.f32 %v452, %v596
    %v598 = vpop.f32.mrf.mxu0
    %599 = vmatprep.mubr.f32.mxu0 0.0
    %600 = vmatmul.mubr.f32.gmra.mxu0 %v276
    %v601 = vpop.f32.mrf.mxu0
    %v602 = vadd.f32 %v457, %v601
    %v603 = vpop.f32.mrf.mxu0
    %604 = vmatprep.mubr.f32.mxu0 0.0
    %605 = vmatmul.mubr.f32.gmra.mxu0 %v277
    %v606 = vpop.f32.mrf.mxu0
    %v607 = vadd.f32 %v462, %v606
    %v608 = vpop.f32.mrf.mxu0
    %609 = vmatprep.mubr.f32.mxu0 0.0
    %610 = vmatmul.mubr.f32.gmra.mxu0 %v278
    %v611 = vpop.f32.mrf.mxu0
    %v612 = vadd.f32 %v467, %v611
    %v613 = vpop.f32.mrf.mxu0
    %614 = vmatprep.mubr.f32.mxu0 0.0
    %615 = vmatmul.mubr.f32.gmra.mxu0 %v279
    %v616 = vpop.f32.mrf.mxu0
    %v617 = vadd.f32 %v472, %v616
    %v618 = vpop.f32.mrf.mxu0
    %619 = vmatprep.mubr.f32.mxu0 0.0
    %620 = vmatmul.mubr.f32.gmra.mxu0 %v280
    %v621 = vpop.f32.mrf.mxu0
    %v622 = vadd.f32 %v477, %v621
    %v623 = vpop.f32.mrf.mxu0
    %624 = vmatprep.mubr.f32.mxu0 0.0
    %625 = vmatmul.mubr.f32.gmra.mxu0 %v281
    %v626 = vpop.f32.mrf.mxu0
    %v627 = vadd.f32 %v482, %v626
    %v628 = vpop.f32.mrf.mxu0
    %629 = vmatprep.mubr.f32.mxu0 0.0
    %630 = vmatmul.mubr.f32.gmra.mxu0 %v282
    %v631 = vpop.f32.mrf.mxu0
    %v632 = vadd.f32 %v487, %v631
    %v633 = vpop.f32.mrf.mxu0
    %634 = vmatprep.mubr.f32.mxu0 0.0
    %635 = vmatmul.mubr.f32.gmra.mxu0 %v283
    %v636 = vpop.f32.mrf.mxu0
    %v637 = vadd.f32 %v492, %v636
    %v638 = vpop.f32.mrf.mxu0
    %639 = vmatprep.mubr.f32.mxu0 0.0
    %640 = vmatmul.mubr.f32.gmra.mxu0 %v284
    %v641 = vpop.f32.mrf.mxu0
    %v642 = vadd.f32 %v497, %v641
    %v643 = vpop.f32.mrf.mxu0
    %644 = vdwg.mxu0
    %v645 = vld [vmem:[%s6] sm:$0x1]
    %v647 = vlaneseq
    %v648 = vshrl.u32 %v647, 7
    %v649 = vsub.s32 0, %v648
    %v650 = vrot.slane %v645, %v649
    %v652 = vadd.f32 %v567, %v650
    %v653 = vadd.f32 %v572, %v650
    %v654 = vadd.f32 %v577, %v650
    %v655 = vadd.f32 %v582, %v650
    %v656 = vadd.f32 %v587, %v650
    %v657 = vadd.f32 %v592, %v650
    %v658 = vadd.f32 %v597, %v650
    %v659 = vadd.f32 %v602, %v650
    %v660 = vadd.f32 %v607, %v650
    %v661 = vadd.f32 %v612, %v650
    %v662 = vadd.f32 %v617, %v650
    %v663 = vadd.f32 %v622, %v650
    %v664 = vadd.f32 %v627, %v650
    %v665 = vadd.f32 %v632, %v650
    %v666 = vadd.f32 %v637, %v650
    %v667 = vadd.f32 %v642, %v650
    %v668 = vmax.f32 %v652, 0.0
    %v669 = vmax.f32 %v653, 0.0
    %v670 = vmax.f32 %v654, 0.0
    %v671 = vmax.f32 %v655, 0.0
    %v672 = vmax.f32 %v656, 0.0
    %v673 = vmax.f32 %v657, 0.0
    %v674 = vmax.f32 %v658, 0.0
    %v675 = vmax.f32 %v659, 0.0
    %v676 = vmax.f32 %v660, 0.0
    %v677 = vmax.f32 %v661, 0.0
    %v678 = vmax.f32 %v662, 0.0
    %v679 = vmax.f32 %v663, 0.0
    %v680 = vmax.f32 %v664, 0.0
    %v681 = vmax.f32 %v665, 0.0
    %v682 = vmax.f32 %v666, 0.0
    %v683 = vmax.f32 %v667, 0.0
    %v684 = vld [vmem:[%s7] sm:$0x1]
    %s685 = sld [smem:[#allocation2]]
    %v686 = vstv %s685
    %vm687 = vcmask 523264
    %v689 = vsel %vm687, %v684, 0
    %v692 = vsel %vm687, %v668, 0
    %v695 = vsel %vm687, %v669, 0
    %v698 = vsel %vm687, %v670, 0
    %v701 = vsel %vm687, %v671, 0
    %v704 = vsel %vm687, %v672, 0
    %v707 = vsel %vm687, %v673, 0
    %v710 = vsel %vm687, %v674, 0
    %v713 = vsel %vm687, %v675, 0
    %v716 = vsel %vm687, %v676, 0
    %v719 = vsel %vm687, %v677, 0
    %v722 = vsel %vm687, %v678, 0
    %v725 = vsel %vm687, %v679, 0
    %v728 = vsel %vm687, %v680, 0
    %v731 = vsel %vm687, %v681, 0
    %v734 = vsel %vm687, %v682, 0
    %v737 = vsel %vm687, %v683, 0
    %739 = vmatprep.subr.mxu0 0.0
    %740 = vmatpush1.xpose.msra.mxu0 %v737
    %741 = vmatprep.subr.mxu0 0.0
    %742 = vmatpush1.xpose.msra.mxu0 %v734
    %743 = vmatprep.subr.mxu0 0.0
    %744 = vmatpush1.xpose.msra.mxu0 %v731
    %745 = vmatprep.subr.mxu0 0.0
    %746 = vmatpush1.xpose.msra.mxu0 %v728
    %747 = vmatprep.subr.mxu0 0.0
    %748 = vmatpush1.xpose.msra.mxu0 %v725
    %749 = vmatprep.subr.mxu0 0.0
    %750 = vmatpush1.xpose.msra.mxu0 %v722
    %751 = vmatprep.subr.mxu0 0.0
    %752 = vmatpush1.xpose.msra.mxu0 %v719
    %753 = vmatprep.subr.mxu0 0.0
    %754 = vmatpush1.xpose.msra.mxu0 %v716
    %755 = vmatprep.subr.mxu0 0.0
    %756 = vmatpush1.xpose.msra.mxu0 %v713
    %757 = vmatprep.subr.mxu0 0.0
    %758 = vmatpush1.xpose.msra.mxu0 %v710
    %759 = vmatprep.subr.mxu0 0.0
    %760 = vmatpush1.xpose.msra.mxu0 %v707
    %761 = vmatprep.subr.mxu0 0.0
    %762 = vmatpush1.xpose.msra.mxu0 %v704
    %763 = vmatprep.subr.mxu0 0.0
    %764 = vmatpush1.xpose.msra.mxu0 %v701
    %765 = vmatprep.subr.mxu0 0.0
    %766 = vmatpush1.xpose.msra.mxu0 %v698
    %767 = vmatprep.subr.mxu0 0.0
    %768 = vmatpush1.xpose.msra.mxu0 %v695
    %769 = vmatprep.subr.mxu0 0.0
    %770 = vmatpush1.xpose.msra.mxu0 %v692
    %771 = vmatprep.subr.mxu0 0.0
    %772 = vmatpush2.xpose.msra.mxu0 0.0
    %773 = vmatprep.subr.mxu0 0.0
    %774 = vmatpush2.xpose.msra.mxu0 0.0
    %775 = vmatprep.subr.mxu0 0.0
    %776 = vmatpush2.xpose.msra.mxu0 0.0
    %777 = vmatprep.subr.mxu0 0.0
    %778 = vmatpush2.xpose.msra.mxu0 0.0
    %779 = vmatprep.subr.mxu0 0.0
    %780 = vmatpush2.xpose.msra.mxu0 0.0
    %781 = vmatprep.subr.mxu0 0.0
    %782 = vmatpush2.xpose.msra.mxu0 0.0
    %783 = vmatprep.subr.mxu0 0.0
    %784 = vmatpush2.xpose.msra.mxu0 0.0
    %785 = vmatprep.subr.mxu0 0.0
    %786 = vmatpush2.xpose.msra.mxu0 0.0
    %787 = vmatprep.subr.mxu0 0.0
    %788 = vmatpush2.xpose.msra.mxu0 0.0
    %789 = vmatprep.subr.mxu0 0.0
    %790 = vmatpush2.xpose.msra.mxu0 0.0
    %791 = vmatprep.subr.mxu0 0.0
    %792 = vmatpush2.xpose.msra.mxu0 0.0
    %793 = vmatprep.subr.mxu0 0.0
    %794 = vmatpush2.xpose.msra.mxu0 0.0
    %795 = vmatprep.subr.mxu0 0.0
    %796 = vmatpush2.xpose.msra.mxu0 0.0
    %797 = vmatprep.subr.mxu0 0.0
    %798 = vmatpush2.xpose.msra.mxu0 0.0
    %799 = vmatprep.subr.mxu0 0.0
    %800 = vmatpush2.xpose.msra.mxu0 0.0
    %801 = vmatprep.subr.mxu0 0.0
    %802 = vmatpush2.xpose.msra.mxu0 0.0
    %803 = vmatprep.mubr.f32.mxu0 0.0
    %804 = vmatmul.mubr.f32.gmra.mxu0 %v689
    %v805 = vpop.f32.mrf.mxu0
    %v806 = vadd.f32 %v686, %v805
    %v807 = vpop.f32.mrf.mxu0
    %808 = vdwg.mxu0
    %809 = vst [vmem:[#allocation3] sm:$0x1] %v806
    // Predicated region
    $region38: #{tpu_custom_call.1} parent=1 // pred_check
      _
    $region39: #{tpu_custom_call.1} parent=1 // pred_check_branch
      %811 = sbr.rel (0) target = $region41
    $region40: #{tpu_custom_call.1} parent=1 // pred_region
      %s813 = ssub.s32 16, 16
      %814 = vsyncadd [#allocation4], %s813
      %s816 = sshll.u32 [#allocation3], 4
      %s817 = int_to_ptr.vmem [resolvable:$true] %s816
      %819 = dma.vmem_to_hbm [thread:$0]  %s817, 16, %s9, [#allocation4]
    $region41: #{tpu_custom_call.1} parent=1 // pred_fallthru
      _
    // Predicated region
    $region42: #{tpu_custom_call.1} parent=1 // pred_check
      _
    $region43: #{tpu_custom_call.1} parent=1 // pred_check_branch
      %821 = sbr.rel (0) target = $region45
    $region44: #{tpu_custom_call.1} parent=1 // pred_region
      %822 = dma.done [#allocation4], 16
    $region45: #{tpu_custom_call.1} parent=1 // pred_fallthru
      _
    %823 = vsyncpa [#allocation4], 1

</llo_original>
